<compile_context>
chip_gen: v5e
topology: v5e:2x2
jax: 0.10.0
libtpu: 0.0.40
codegen_flags: <defaults>
</compile_context>

<pallas_src>
from typing import NamedTuple

import numpy as np

import jax
import jax.numpy as jnp
from jax.experimental import pallas as pl
from jax.experimental.pallas import tpu as pltpu


def _round_up(x, m):
    return ((x + m - 1) // m) * m


def _mxu_granule():
    """Padding granule for hidden/label dims above 128.

    v6e/v7x have 256-wide MXUs -> pad to multiples of 256 to avoid half-width
    passes; v5e and older have 128-wide MXUs -> keep 128 granularity.
    """
    try:
        kind = jax.devices()[0].device_kind.lower()
    except Exception:
        return 128
    if any(v in kind for v in ("v2", "v3", "v4", "v5")):
        return 128
    return 256


def _default_vmem_limit_bytes():
    """Generation-aware VMEM budget: ~60% of physical capacity, capped.

    v7x: 64 MiB physical -> ~38 MiB budget; v5e/v6e: 128 MiB -> ~77 MiB.
    Leaves headroom for compiler scratch and double-buffered IO tiles.
    """
    cap = 64 * 1024 * 1024
    try:
        cap = int(pltpu.get_tpu_info().vmem_capacity_bytes)
    except Exception:
        pass
    return max(min(int(cap * 0.6), 96 * 1024 * 1024), 32 * 1024 * 1024)


class ChartSpanParams(NamedTuple):
    """Padded + cast label_ffn parameters, materialised ONCE at init."""
    w1: jax.Array   # (lstm_dim, h_pad)   compute dtype
    b1: jax.Array   # (1, h_pad)          f32
    w2: jax.Array   # (h_pad, l_pad)      compute dtype
    b2: jax.Array   # (1, l_pad)          f32
    n_label: int    # true (unpadded) number of parse labels


def prepare_chart_span_params(w1, b1, w2, b2, *, compute_dtype=jnp.float32,
                              granule=None):
    """Pad hidden/label dims lane-dense and cast the weights, once at init.

    The per-call forward wrapper then only launches the kernel: no per-call
    XLA pad/cast passes and no extra HBM round-trips for the weights.
    bf16 compute_dtype is usable on every TPU generation (v5e included);
    biases stay f32 and both matmuls accumulate in f32.
    """
    if granule is None:
        granule = _mxu_granule()
    hidden = w1.shape[1]
    n_label = w2.shape[1]
    h_pad = _round_up(hidden, 128) if hidden <= 128 else _round_up(hidden, granule)
    l_pad = _round_up(n_label, 128) if n_label <= 128 else _round_up(n_label, granule)

    w1p = jnp.pad(w1, ((0, 0), (0, h_pad - hidden))).astype(compute_dtype)
    b1p = jnp.pad(b1, (0, h_pad - hidden)).reshape(1, h_pad).astype(jnp.float32)
    w2p = jnp.pad(w2, ((0, h_pad - hidden),
                       (0, l_pad - n_label))).astype(compute_dtype)
    b2p = jnp.pad(b2, (0, l_pad - n_label)).reshape(1, l_pad).astype(jnp.float32)
    return ChartSpanParams(w1p, b1p, w2p, b2p, int(n_label))


def chart_span_ffn_kernel(x_ref, w1_ref, b1_ref, w2_ref, b2_ref, o_ref):
    # Per-tile activation cast in-register (identity on the f32 path, cheap
    # VPU work on the bf16 path); the span stays f32 in HBM.
    x = x_ref[...].astype(w1_ref.dtype)
    # h = relu(x @ W1 + b1); MXU matmul with f32 accumulation.
    h = jnp.dot(x, w1_ref[...], preferred_element_type=jnp.float32)
    h = jnp.maximum(h + b1_ref[...], 0.0)
    # y = h @ W2 + b2; on the bf16 path h is rounded back to bf16 so the
    # second dot also runs at full MXU rate; accumulation stays f32.
    y = jnp.dot(h.astype(w2_ref.dtype), w2_ref[...],
                preferred_element_type=jnp.float32)
    o_ref[...] = (y + b2_ref[...]).astype(o_ref.dtype)


def chart_span_parser_forward(span, params, *, tile_m=512,
                              single_buffer_weights=None,
                              vmem_limit_bytes=None,
                              out_dtype=jnp.float32):
    """Fused label_ffn forward: (N, lstm_dim) -> (N, num_parse_label).

    `span` may hold spans from MANY sentences concatenated along rows (as in
    get_loss / predict batching); with enough rows that the grid has >= 2
    steps, dimension_semantics=("parallel",) shards the row axis across
    v7x's two TensorCores.
    """
    w1p, b1p, w2p, b2p, n_label = params
    n, d = span.shape
    h_pad = w1p.shape[1]
    l_pad = w2p.shape[1]

    # Row tile: big tiles amortise the ~0.35 us/step grid overhead and give
    # long contiguous activation/output DMAs (the kernel is mem-bound).
    # Multiple of 8 (f32 sublane) unless the whole problem fits in one tile,
    # in which case take the full row extent (always a legal block shape).
    tile_m = max(8, (tile_m // 8) * 8)
    bm = n if n <= tile_m else tile_m
    grid = (pl.cdiv(n, bm),)

    # Resident operands (constant index_map): single-buffer them once they
    # are big enough to matter (halves resident-weight VMEM; most important
    # on v7x's 64 MiB VMEM).  Tiny weights keep the portable default.
    weight_bytes = sum(int(a.size) * a.dtype.itemsize
                       for a in (w1p, b1p, w2p, b2p))
    if single_buffer_weights is None:
        single_buffer_weights = weight_bytes >= (1 << 20)

    def const_spec(shape):
        if single_buffer_weights:
            return pl.BlockSpec(shape, lambda i: (0, 0),
                                pipeline_mode=pl.Buffered(1))
        return pl.BlockSpec(shape, lambda i: (0, 0))

    if vmem_limit_bytes is None:
        vmem_limit_bytes = _default_vmem_limit_bytes()

    out_itemsize = np.dtype(out_dtype).itemsize
    cost = pl.CostEstimate(
        flops=2 * n * (d * h_pad + h_pad * l_pad),
        transcendentals=0,
        bytes_accessed=(n * d * span.dtype.itemsize
                        + n * l_pad * out_itemsize
                        + weight_bytes),
    )

    out = pl.pallas_call(
        chart_span_ffn_kernel,
        out_shape=jax.ShapeDtypeStruct((n, l_pad), out_dtype),
        grid_spec=pltpu.PrefetchScalarGridSpec(
            num_scalar_prefetch=0,
            grid=grid,
            in_specs=[
                pl.BlockSpec((bm, d), lambda i: (i, 0)),   # span rows (streamed, f32)
                const_spec((d, h_pad)),                    # W1 (resident)
                const_spec((1, h_pad)),                    # b1
                const_spec((h_pad, l_pad)),                # W2 (resident)
                const_spec((1, l_pad)),                    # b2
            ],
            out_specs=pl.BlockSpec((bm, l_pad), lambda i: (i, 0)),
        ),
        compiler_params=pltpu.CompilerParams(
            dimension_semantics=("parallel",),
            vmem_limit_bytes=vmem_limit_bytes,
        ),
        cost_estimate=cost,
    )(span, w1p, b1p, w2p, b2p)

    # Drop the lane-padding label columns.
    return out[:, :n_label]


# TODO(synk): CKY / trace_back / get_loss / predict are host-side,
# data-dependent recursion and per-sentence Python loops; they are not part of
# forward() and have no clean single-kernel Pallas equivalent.


if __name__ == "__main__":
    # Small shapes consistent with the module: a sentence of length 8 gives
    # (1+8)*8//2 = 36 spans, each an lstm_dim-dimensional vector.
    sen_len = 8
    num_spans = (1 + sen_len) * sen_len // 2   # 36
    lstm_dim = 32
    label_hidden_dim = 64
    num_parse_label = 16

    key = jax.random.PRNGKey(0)
    k_x, k_w1, k_b1, k_w2, k_b2, k_big = jax.random.split(key, 6)

    span = jax.random.normal(k_x, (num_spans, lstm_dim), dtype=jnp.float32)

    # Deterministic param init (PyTorch-Linear-style uniform +-1/sqrt(fan_in)).
    lim1 = 1.0 / (lstm_dim ** 0.5)
    lim2 = 1.0 / (label_hidden_dim ** 0.5)
    w1 = jax.random.uniform(k_w1, (lstm_dim, label_hidden_dim),
                            minval=-lim1, maxval=lim1, dtype=jnp.float32)
    b1 = jax.random.uniform(k_b1, (label_hidden_dim,),
                            minval=-lim1, maxval=lim1, dtype=jnp.float32)
    w2 = jax.random.uniform(k_w2, (label_hidden_dim, num_parse_label),
                            minval=-lim2, maxval=lim2, dtype=jnp.float32)
    b2 = jax.random.uniform(k_b2, (num_parse_label,),
                            minval=-lim2, maxval=lim2, dtype=jnp.float32)

    # Pure-JAX reference of the fused FFN.
    def ref_fn(x):
        return jnp.maximum(x @ w1 + b1, 0.0) @ w2 + b2

    # Parameters padded + cast once (hoisted out of the per-call path).
    params_f32 = prepare_chart_span_params(w1, b1, w2, b2,
                                           compute_dtype=jnp.float32)
    params_bf16 = prepare_chart_span_params(w1, b1, w2, b2,
                                            compute_dtype=jnp.bfloat16)

    # f32 path: exact parity with the PyTorch module.
    out_f32 = jax.block_until_ready(
        chart_span_parser_forward(span, params_f32))
    assert out_f32.shape == (num_spans, num_parse_label)
    assert jnp.allclose(out_f32, ref_fn(span), atol=1e-5, rtol=1e-5)

    # bf16 MXU path (valid on v5e/v6e/v7x): f32 accumulation, looser tolerance.
    out_bf16 = jax.block_until_ready(
        chart_span_parser_forward(span, params_bf16))
    assert out_bf16.shape == (num_spans, num_parse_label)
    assert jnp.allclose(out_bf16, ref_fn(span), atol=1e-1, rtol=1e-1)

    # Batched call (spans from several sentences concatenated, as get_loss /
    # predict would do): exercises a multi-step row grid (incl. a masked edge
    # block) and gives v7x's second TensorCore work via the parallel row axis.
    big_span = jax.random.normal(k_big, (288, lstm_dim), dtype=jnp.float32)
    out_big = jax.block_until_ready(
        chart_span_parser_forward(big_span, params_f32, tile_m=128))
    assert out_big.shape == (288, num_parse_label)
    assert jnp.allclose(out_big, ref_fn(big_span), atol=1e-5, rtol=1e-5)

    print("KERNEL_OK")
</pallas_src>

<mosaic_0001>
module attributes {stable_mosaic.version = 11 : i64} {
  func.func @chart_span_ffn_kernel(%arg0: i32, %arg1: memref<36x32xf32, #tpu.memory_space<vmem>>, %arg2: memref<32x128xf32, #tpu.memory_space<vmem>>, %arg3: memref<1x128xf32, #tpu.memory_space<vmem>>, %arg4: memref<128x128xf32, #tpu.memory_space<vmem>>, %arg5: memref<1x128xf32, #tpu.memory_space<vmem>>, %arg6: memref<36x128xf32, #tpu.memory_space<vmem>>) attributes {dimension_semantics = [#tpu.dimension_semantics<parallel>], iteration_bounds = array<i64: 1>, scalar_prefetch = 0 : i64, scratch_operands = 0 : i64, tpu.core_type = #tpu.core_type<tc>, window_params = [{transform_indices = @transform_0, window_bounds = array<i64: 36, 32>}, {pipeline_mode = #tpu.pipeline_mode<synchronous>, transform_indices = @transform_1, window_bounds = array<i64: 32, 128>}, {pipeline_mode = #tpu.pipeline_mode<synchronous>, transform_indices = @transform_2, window_bounds = array<i64: 1, 128>}, {pipeline_mode = #tpu.pipeline_mode<synchronous>, transform_indices = @transform_3, window_bounds = array<i64: 128, 128>}, {pipeline_mode = #tpu.pipeline_mode<synchronous>, transform_indices = @transform_4, window_bounds = array<i64: 1, 128>}, {transform_indices = @transform_5, window_bounds = array<i64: 36, 128>}]} {
    %c0 = arith.constant 0 : index
    %c0_0 = arith.constant 0 : index
    %0 = vector.load %arg1[%c0, %c0_0] : memref<36x32xf32, #tpu.memory_space<vmem>>, vector<36x32xf32>
    %c0_1 = arith.constant 0 : index
    %c0_2 = arith.constant 0 : index
    %1 = vector.load %arg2[%c0_1, %c0_2] : memref<32x128xf32, #tpu.memory_space<vmem>>, vector<32x128xf32>
    %cst = arith.constant dense<0.000000e+00> : vector<36x128xf32>
    %2 = tpu.matmul %0, %1, %cst {dimension_numbers = #tpu.dot_dimension_numbers<[1], [0], [0], [1], [0, 0, 1, 1], [], []>} : vector<36x32xf32>, vector<32x128xf32>, vector<36x128xf32> -> vector<36x128xf32>
    %c0_3 = arith.constant 0 : index
    %c0_4 = arith.constant 0 : index
    %3 = vector.load %arg3[%c0_3, %c0_4] : memref<1x128xf32, #tpu.memory_space<vmem>>, vector<1x128xf32>
    %4 = vector.broadcast %3 : vector<1x128xf32> to vector<36x128xf32>
    %5 = arith.addf %2, %4 : vector<36x128xf32>
    %cst_5 = arith.constant 0.000000e+00 : f32
    %6 = vector.broadcast %cst_5 : f32 to vector<36x128xf32>
    %7 = arith.maximumf %5, %6 : vector<36x128xf32>
    %c0_6 = arith.constant 0 : index
    %c0_7 = arith.constant 0 : index
    %8 = vector.load %arg4[%c0_6, %c0_7] : memref<128x128xf32, #tpu.memory_space<vmem>>, vector<128x128xf32>
    %cst_8 = arith.constant dense<0.000000e+00> : vector<36x128xf32>
    %9 = tpu.matmul %7, %8, %cst_8 {dimension_numbers = #tpu.dot_dimension_numbers<[1], [0], [0], [1], [0, 0, 1, 1], [], []>} : vector<36x128xf32>, vector<128x128xf32>, vector<36x128xf32> -> vector<36x128xf32>
    %c0_9 = arith.constant 0 : index
    %c0_10 = arith.constant 0 : index
    %10 = vector.load %arg5[%c0_9, %c0_10] : memref<1x128xf32, #tpu.memory_space<vmem>>, vector<1x128xf32>
    %11 = vector.broadcast %10 : vector<1x128xf32> to vector<36x128xf32>
    %12 = arith.addf %9, %11 : vector<36x128xf32>
    %c0_11 = arith.constant 0 : index
    %c0_12 = arith.constant 0 : index
    %13 = vector.load %arg6[%c0_11, %c0_12] : memref<36x128xf32, #tpu.memory_space<vmem>>, vector<36x128xf32>
    tpu.vector_store %arg6[%c0_11, %c0_12], %12 {strides = array<i32>} : memref<36x128xf32, #tpu.memory_space<vmem>>, vector<36x128xf32>,
    return
  }
  func.func @transform_0(%arg0: i32) -> (i32, i32) {
    %c0_i32 = arith.constant 0 : i32
    %c0_i32_0 = arith.constant 0 : i32
    return %arg0, %c0_i32 : i32, i32
  }
  func.func @transform_1(%arg0: i32) -> (i32, i32) {
    %c0_i32 = arith.constant 0 : i32
    %c0_i32_0 = arith.constant 0 : i32
    %c0_i32_1 = arith.constant 0 : i32
    return %c0_i32, %c0_i32_0 : i32, i32
  }
  func.func @transform_2(%arg0: i32) -> (i32, i32) {
    %c0_i32 = arith.constant 0 : i32
    %c0_i32_0 = arith.constant 0 : i32
    %c0_i32_1 = arith.constant 0 : i32
    return %c0_i32, %c0_i32_0 : i32, i32
  }
  func.func @transform_3(%arg0: i32) -> (i32, i32) {
    %c0_i32 = arith.constant 0 : i32
    %c0_i32_0 = arith.constant 0 : i32
    %c0_i32_1 = arith.constant 0 : i32
    return %c0_i32, %c0_i32_0 : i32, i32
  }
  func.func @transform_4(%arg0: i32) -> (i32, i32) {
    %c0_i32 = arith.constant 0 : i32
    %c0_i32_0 = arith.constant 0 : i32
    %c0_i32_1 = arith.constant 0 : i32
    return %c0_i32, %c0_i32_0 : i32, i32
  }
  func.func @transform_5(%arg0: i32) -> (i32, i32) {
    %c0_i32 = arith.constant 0 : i32
    %c0_i32_0 = arith.constant 0 : i32
    return %arg0, %c0_i32 : i32, i32
  }
}

</mosaic_0001>

<llo_original>
// kernel: tpu_custom_call.1
$region0: #{tpu_custom_call.1}
  #allocation0 [shape = 'u32[]', space=smem, size = 0x4, offset = 0x4, fixed_abs, tag = 'smem constant byte address 0x4 - core index']
  #allocation1 [shape = 'u32[72,128]{1,0:T(1,128)}', space=vmem, size = 0x9000, scoped, tag = 'internal scratch']
  %s0 = inlined_call_operand.vmem [shape: f32[36,32], index: 0, kind: input, shape index: {}]
  %s1 = inlined_call_operand.vmem [shape: f32[32,128], index: 1, kind: input, shape index: {}]
  %s2 = inlined_call_operand.vmem [shape: f32[1,128], index: 2, kind: input, shape index: {}]
  %s3 = inlined_call_operand.hbm [shape: f32[128,128], index: 3, kind: input, shape index: {}]
  %s4 = inlined_call_operand.vmem [shape: f32[1,128], index: 4, kind: input, shape index: {}]
  %s5 = inlined_call_operand.hbm [shape: f32[36,128], index: 5, kind: output, shape index: {}]
  %s6 = sld [smem:[#allocation0]]
  $region34: #{tpu_custom_call.1} parent=0
    _
  %s8 = ssub.s32 1, %s6
  %s9 = scalar_select 0, %s8, %s6
  $region1: #{tpu_custom_call.1} parent=0
    #allocation2 [shape = 'u8[65536]{0}', space=vmem, size = 0x10000, scoped, tag = 'input window, operand 3, single buffered']
    #allocation3 [shape = 's32[1]{0}', space=sflag, size = 0x4, scoped, tag = 'scoped memory for tpu_custom_call.1']
    #allocation4 [shape = 's32[1]{0}', space=sflag, size = 0x4, scoped, tag = 'scoped memory for tpu_custom_call.1']
    #allocation5 [shape = 'u8[20480]{0}', space=vmem, size = 0x5000, scoped, tag = 'output window, operand 0, single buffered']
    %10 = vsyncpa [#allocation3], 0
    %11 = vsyncpa [#allocation4], 0
    // Predicated region
    $region2: #{tpu_custom_call.1} parent=1 // pred_check
      _
    $region3: #{tpu_custom_call.1} parent=1 // pred_check_branch
      %13 = sbr.rel (0) target = $region5
    $region4: #{tpu_custom_call.1} parent=1 // pred_region
      _
    $region5: #{tpu_custom_call.1} parent=1 // pred_fallthru
      _
    // Predicated region
    $region6: #{tpu_custom_call.1} parent=1 // pred_check
      _
    $region7: #{tpu_custom_call.1} parent=1 // pred_check_branch
      %15 = sbr.rel (0) target = $region9
    $region8: #{tpu_custom_call.1} parent=1 // pred_region
      _
    $region9: #{tpu_custom_call.1} parent=1 // pred_fallthru
      _
    // Predicated region
    $region10: #{tpu_custom_call.1} parent=1 // pred_check
      _
    $region11: #{tpu_custom_call.1} parent=1 // pred_check_branch
      %17 = sbr.rel (0) target = $region13
    $region12: #{tpu_custom_call.1} parent=1 // pred_region
      _
    $region13: #{tpu_custom_call.1} parent=1 // pred_fallthru
      _
    // Predicated region
    $region14: #{tpu_custom_call.1} parent=1 // pred_check
      _
    $region15: #{tpu_custom_call.1} parent=1 // pred_check_branch
      %19 = sbr.rel (0) target = $region17
    $region16: #{tpu_custom_call.1} parent=1 // pred_region
      %21 = vsyncadd [#allocation3], 0
      %s22 = sshll.u32 %s3, 4
      %s23 = int_to_ptr.hbm [resolvable:$true] %s22
      %s24 = sshll.u32 [#allocation2], 4
      %s25 = int_to_ptr.vmem [resolvable:$true] %s24
      %30 = dma.hbm_to_vmem [thread:$0]  %s23, 2048, %s25, [#allocation3], 128, 128, 8
    $region17: #{tpu_custom_call.1} parent=1 // pred_fallthru
      _
    // Predicated region
    $region18: #{tpu_custom_call.1} parent=1 // pred_check
      _
    $region19: #{tpu_custom_call.1} parent=1 // pred_check_branch
      %32 = sbr.rel (0) target = $region21
    $region20: #{tpu_custom_call.1} parent=1 // pred_region
      _
    $region21: #{tpu_custom_call.1} parent=1 // pred_fallthru
      _
    // Predicated region
    $region22: #{tpu_custom_call.1} parent=1 // pred_check
      _
    $region23: #{tpu_custom_call.1} parent=1 // pred_check_branch
      %34 = sbr.rel (0) target = $region25
    $region24: #{tpu_custom_call.1} parent=1 // pred_region
      %36 = dma.done [#allocation3], 2048
    $region25: #{tpu_custom_call.1} parent=1 // pred_fallthru
      _
    %v37 = vld [vmem:[%s0] sm:$0xff]
    %v38 = vld [vmem:[%s0 + $0x8] sm:$0xff]
    %v39 = vld [vmem:[%s0 + $0x10] sm:$0xff]
    %v40 = vld [vmem:[%s0 + $0x18] sm:$0xff]
    %v41 = vld [vmem:[%s0 + $0x20] sm:$0xf]
    %v42 = vld [vmem:[%s1] sm:$0xff]
    %v43 = vld [vmem:[%s1 + $0x8] sm:$0xff]
    %v44 = vld [vmem:[%s1 + $0x10] sm:$0xff]
    %v45 = vld [vmem:[%s1 + $0x18] sm:$0xff]
    %v46 = vld [vmem:[%s2] sm:$0x1]
    %v48 = vperm.slane %v46, 0
    %vm50 = vcmask 261120
    %v52 = vsel %vm50, %v37, 0
    %v55 = vsel %vm50, %v38, 0
    %v58 = vsel %vm50, %v39, 0
    %v61 = vsel %vm50, %v40, 0
    %v64 = vsel %vm50, %v41, 0
    %66 = vmatpush.msra.mxu0 0.0
    %67 = vmatpush.msra.mxu0 0.0
    %68 = vmatpush.msra.mxu0 0.0
    %69 = vmatpush.msra.mxu0 0.0
    %70 = vmatpush.msra.mxu0 0.0
    %71 = vmatpush.msra.mxu0 0.0
    %72 = vmatpush.msra.mxu0 0.0
    %73 = vmatpush.msra.mxu0 0.0
    %74 = vmatpush.msra.mxu0 0.0
    %75 = vmatpush.msra.mxu0 0.0
    %76 = vmatpush.msra.mxu0 0.0
    %77 = vmatpush.msra.mxu0 0.0
    %78 = vmatpush.msra.mxu0 %v45
    %79 = vmatpush.msra.mxu0 %v44
    %80 = vmatpush.msra.mxu0 %v43
    %81 = vmatpush.msra.mxu0 %v42
    %82 = vmatmul.f32.gmra.mxu0 %v52
    %v83 = vpop.f32.mrf.mxu0
    %v84 = vadd.f32 %v48, %v83
    %85 = vmatmul.f32.gmra.mxu0 %v55
    %v86 = vpop.f32.mrf.mxu0
    %v87 = vadd.f32 %v48, %v86
    %88 = vmatmul.f32.gmra.mxu0 %v58
    %v89 = vpop.f32.mrf.mxu0
    %v90 = vadd.f32 %v48, %v89
    %91 = vmatmul.f32.gmra.mxu0 %v61
    %v92 = vpop.f32.mrf.mxu0
    %v93 = vadd.f32 %v48, %v92
    %94 = vmatmul.f32.gmra.mxu0 %v64
    %v95 = vpop.f32.mrf.mxu0
    %v96 = vadd.f32 %v48, %v95
    %97 = vdwg.mxu0
    %v98 = vmax.f32 %v84, 0.0
    %v99 = vmax.f32 %v87, 0.0
    %v100 = vmax.f32 %v90, 0.0
    %v101 = vmax.f32 %v93, 0.0
    %v102 = vmax.f32 %v96, 0.0
    %v103 = vld [vmem:[#allocation2] sm:$0xff]
    %v104 = vld [vmem:[#allocation2 + $0x8] sm:$0xff]
    %v105 = vld [vmem:[#allocation2 + $0x10] sm:$0xff]
    %v106 = vld [vmem:[#allocation2 + $0x18] sm:$0xff]
    %v107 = vld [vmem:[#allocation2 + $0x20] sm:$0xff]
    %v108 = vld [vmem:[#allocation2 + $0x28] sm:$0xff]
    %v109 = vld [vmem:[#allocation2 + $0x30] sm:$0xff]
    %v110 = vld [vmem:[#allocation2 + $0x38] sm:$0xff]
    %v111 = vld [vmem:[#allocation2 + $0x40] sm:$0xff]
    %v112 = vld [vmem:[#allocation2 + $0x48] sm:$0xff]
    %v113 = vld [vmem:[#allocation2 + $0x50] sm:$0xff]
    %v114 = vld [vmem:[#allocation2 + $0x58] sm:$0xff]
    %v115 = vld [vmem:[#allocation2 + $0x60] sm:$0xff]
    %v116 = vld [vmem:[#allocation2 + $0x68] sm:$0xff]
    %v117 = vld [vmem:[#allocation2 + $0x70] sm:$0xff]
    %v118 = vld [vmem:[#allocation2 + $0x78] sm:$0xff]
    %v119 = vld [vmem:[%s4] sm:$0x1]
    %v121 = vperm.slane %v119, 0
    %123 = vmatpush.msra.mxu0 %v118
    %124 = vmatpush.msra.mxu0 %v117
    %125 = vmatpush.msra.mxu0 %v116
    %126 = vmatpush.msra.mxu0 %v115
    %127 = vmatpush.msra.mxu0 %v114
    %128 = vmatpush.msra.mxu0 %v113
    %129 = vmatpush.msra.mxu0 %v112
    %130 = vmatpush.msra.mxu0 %v111
    %131 = vmatpush.msra.mxu0 %v110
    %132 = vmatpush.msra.mxu0 %v109
    %133 = vmatpush.msra.mxu0 %v108
    %134 = vmatpush.msra.mxu0 %v107
    %135 = vmatpush.msra.mxu0 %v106
    %136 = vmatpush.msra.mxu0 %v105
    %137 = vmatpush.msra.mxu0 %v104
    %138 = vmatpush.msra.mxu0 %v103
    %139 = vmatmul.f32.gmra.mxu0 %v98
    %v140 = vpop.f32.mrf.mxu0
    %v141 = vadd.f32 %v121, %v140
    %142 = vmatmul.f32.gmra.mxu0 %v99
    %v143 = vpop.f32.mrf.mxu0
    %v144 = vadd.f32 %v121, %v143
    %145 = vmatmul.f32.gmra.mxu0 %v100
    %v146 = vpop.f32.mrf.mxu0
    %v147 = vadd.f32 %v121, %v146
    %148 = vmatmul.f32.gmra.mxu0 %v101
    %v149 = vpop.f32.mrf.mxu0
    %v150 = vadd.f32 %v121, %v149
    %151 = vmatmul.f32.gmra.mxu0 %v102
    %v152 = vpop.f32.mrf.mxu0
    %v153 = vadd.f32 %v121, %v152
    %154 = vdwg.mxu0
    %155 = vst [vmem:[#allocation5] sm:$0xff] %v141
    %156 = vst [vmem:[#allocation5 + $0x8] sm:$0xff] %v144
    %157 = vst [vmem:[#allocation5 + $0x10] sm:$0xff] %v147
    %158 = vst [vmem:[#allocation5 + $0x18] sm:$0xff] %v150
    %159 = vst [vmem:[#allocation5 + $0x20] sm:$0xf] %v153
    // Predicated region
    $region26: #{tpu_custom_call.1} parent=1 // pred_check
      _
    $region27: #{tpu_custom_call.1} parent=1 // pred_check_branch
      %161 = sbr.rel (0) target = $region29
    $region28: #{tpu_custom_call.1} parent=1 // pred_region
      %163 = vsyncadd [#allocation4], 0
      %s164 = sshll.u32 [#allocation5], 4
      %s165 = int_to_ptr.vmem [resolvable:$true] %s164
      %s166 = sshll.u32 %s5, 4
      %s167 = int_to_ptr.hbm [resolvable:$true] %s166
      %172 = dma.vmem_to_hbm [thread:$0]  %s165, 640, %s167, [#allocation4], 128, 128, 8
    $region29: #{tpu_custom_call.1} parent=1 // pred_fallthru
      _
    // Predicated region
    $region30: #{tpu_custom_call.1} parent=1 // pred_check
      _
    $region31: #{tpu_custom_call.1} parent=1 // pred_check_branch
      %174 = sbr.rel (0) target = $region33
    $region32: #{tpu_custom_call.1} parent=1 // pred_region
      %176 = dma.done [#allocation4], 640
    $region33: #{tpu_custom_call.1} parent=1 // pred_fallthru
      _
    %177 = vsyncpa [#allocation3], 1
    %178 = vsyncpa [#allocation4], 1

</llo_original>
